<compile_context>
chip_gen: v7x
topology: tpu7x:2x2x1
jax: 0.10.0
libtpu: 0.0.40
codegen_flags: <defaults>
</compile_context>

<pallas_src>
import functools

import jax
import jax.numpy as jnp
from jax.experimental import pallas as pl
from jax.experimental.pallas import tpu as pltpu

ADV_EPS = 0.05
ITERS = 5
ALPHA = ADV_EPS / 4.0
AUX_COEF = 1e-3          # synthetic aux_loss = AUX_COEF * mean(p_feats ** 2)
NEG_BIAS = -1e9          # bias for padded class columns -> exp underflows to 0
LANE = 128               # TPU lane width: pad class dim to this
SUBLANE = 8              # f32 sublane: batch tile must be a multiple


def _round_up(x, m):
    return (x + m - 1) // m * m


def _afa_kernel(feats_ref, delta0_ref, w_ref, wt_ref, b_ref, onehot_ref,
                out_ref, *, inv_b, aux_scale):
    feats = feats_ref[...]                            # (TB, F) f32
    bias = b_ref[...]                                 # (1, CP) f32, NEG_BIAS in padded cols
    onehot_over_b = onehot_ref[...] * inv_b           # loop-invariant (TB, CP)

    # Loop-invariant bf16 casts of the classifier weights (MXU-native inputs).
    w_bf = w_ref[...].astype(jnp.bfloat16)            # (F, CP)  forward
    wt_bf = wt_ref[...].astype(jnp.bfloat16)          # (CP, F)  backward (pre-transposed)

    delta = delta0_ref[...]                           # loop-carried, lives in vregs

    # Static unroll: ITERS is a small compile-time constant (matches self.iters).
    for _ in range(ITERS):
        p = feats + delta                             # p_feats = feats + delta (f32)

        # forward: logits = p @ W + b   (bf16 MXU inputs, f32 accumulate/elementwise)
        logits = jnp.dot(p.astype(jnp.bfloat16), w_bf,
                         preferred_element_type=jnp.float32) + bias

        # stable softmax; fold 1/B into the EUP approx reciprocal of the denominator
        m = jnp.max(logits, axis=-1, keepdims=True)
        e = jnp.exp(logits - m)
        denom = jnp.sum(e, axis=-1, keepdims=True)
        # d[mean-NLL(log_softmax(logits), labels)]/d logits = (softmax - onehot) / B
        g_logits = e * (inv_b * pl.reciprocal(denom, approx=True)) - onehot_over_b

        # backward: dL/dp = g_logits @ W^T   (W^T precomputed -> no in-loop transpose)
        grad_p = jnp.dot(g_logits.astype(jnp.bfloat16), wt_bf,
                         preferred_element_type=jnp.float32)
        # + gradient of aux_loss = AUX_COEF * mean(p**2)
        grad_p = grad_p + aux_scale * p

        # delta = clamp(delta + alpha * sign(grad), -eps, eps); sign(0) == 0 preserved.
        step = jnp.where(grad_p > 0.0, ALPHA,
                         jnp.where(grad_p < 0.0, -ALPHA, 0.0))
        delta = jnp.clip(delta + step, -ADV_EPS, ADV_EPS)

    out_ref[...] = feats + delta


@functools.partial(jax.jit, static_argnames=("block_b",))
def adversarial_feature_augment(feats, delta0, w, b, labels_onehot, *, block_b=256):
    B, F = feats.shape
    C = w.shape[1]
    CP = _round_up(max(C, LANE), LANE)                # classes padded to full lanes

    # Batch tile: multiple of 8 (f32 sublane), capped for VMEM headroom (v7x: 64 MiB phys).
    tb = min(block_b, _round_up(B, SUBLANE))
    tb = max(SUBLANE, (tb // SUBLANE) * SUBLANE)
    BP = _round_up(B, tb)

    # Pad class dim; padded bias entries get NEG_BIAS so padded classes get 0 softmax mass.
    w_p = jnp.pad(w, ((0, 0), (0, CP - C)))
    wt_p = w_p.T                                      # transpose ONCE, outside the PGD loop
    b_p = jnp.pad(b, ((0, 0), (0, CP - C)), constant_values=NEG_BIAS)

    # Pad batch to a multiple of the tile (per-row gradients are independent, so exact).
    feats_p = feats if BP == B else jnp.pad(feats, ((0, BP - B), (0, 0)))
    delta_p = delta0 if BP == B else jnp.pad(delta0, ((0, BP - B), (0, 0)))
    oh_p = jnp.pad(labels_onehot, ((0, BP - B), (0, CP - C)))

    inv_b = 1.0 / B                                   # loss is a mean over the *real* batch
    aux_scale = 2.0 * AUX_COEF / (B * F)              # d/dp of AUX_COEF * mean(p**2)

    kernel = functools.partial(_afa_kernel, inv_b=inv_b, aux_scale=aux_scale)

    out = pl.pallas_call(
        kernel,
        out_shape=jax.ShapeDtypeStruct((BP, F), jnp.float32),
        grid=(BP // tb,),
        in_specs=[
            pl.BlockSpec((tb, F), lambda i: (i, 0)),   # feats        (tiled over batch)
            pl.BlockSpec((tb, F), lambda i: (i, 0)),   # delta init   (tiled over batch)
            pl.BlockSpec((F, CP), lambda i: (0, 0)),   # W            (resident)
            pl.BlockSpec((CP, F), lambda i: (0, 0)),   # W^T          (resident)
            pl.BlockSpec((1, CP), lambda i: (0, 0)),   # bias         (resident)
            pl.BlockSpec((tb, CP), lambda i: (i, 0)),  # one-hot labels
        ],
        out_specs=pl.BlockSpec((tb, F), lambda i: (i, 0)),
        compiler_params=pltpu.CompilerParams(
            dimension_semantics=("parallel",),         # batch tiles independent -> megacore
            vmem_limit_bytes=32 * 1024 * 1024),        # explicit ceiling, safe on v7x
    )(feats_p, delta_p, w_p, wt_p, b_p, oh_p)

    return out[:B]


if __name__ == "__main__":
    B, F, C = 32, 128, 16  # small shapes: batch, flattened feature dim, num classes

    key = jax.random.PRNGKey(0)
    k_feats, k_delta, k_w, k_b, k_lab = jax.random.split(key, 5)

    feats = jax.random.normal(k_feats, (B, F), dtype=jnp.float32)
    # delta ~ U(-eps, eps)  (matches torch.rand(...) * 2*eps - eps)
    delta0 = jax.random.uniform(k_delta, (B, F), dtype=jnp.float32,
                                minval=-ADV_EPS, maxval=ADV_EPS)
    # deterministic synthetic classifier parameters (the "model")
    w = 0.1 * jax.random.normal(k_w, (F, C), dtype=jnp.float32)
    b = 0.01 * jax.random.normal(k_b, (1, C), dtype=jnp.float32)
    labels = jax.random.randint(k_lab, (B,), 0, C)
    labels_onehot = jax.nn.one_hot(labels, C, dtype=jnp.float32)

    # block_b=8 -> grid=(4,): exercises the batch tiling / parallel axis at toy size.
    adv_feats = adversarial_feature_augment(feats, delta0, w, b, labels_onehot,
                                            block_b=8)
    adv_feats = jax.block_until_ready(adv_feats)

    # sanity: shape preserved, perturbation stays within the eps ball, finite output
    assert adv_feats.shape == (B, F)
    max_pert = float(jnp.max(jnp.abs(adv_feats - feats)))
    assert max_pert <= ADV_EPS + 1e-6, max_pert
    assert bool(jnp.all(jnp.isfinite(adv_feats)))

    print("KERNEL_OK")
</pallas_src>

<mosaic_0001>
module attributes {stable_mosaic.version = 11 : i64} {
  func.func @_afa_kernel(%arg0: i32, %arg1: memref<8x128xf32, #tpu.memory_space<vmem>>, %arg2: memref<8x128xf32, #tpu.memory_space<vmem>>, %arg3: memref<128x128xf32, #tpu.memory_space<vmem>>, %arg4: memref<128x128xf32, #tpu.memory_space<vmem>>, %arg5: memref<1x128xf32, #tpu.memory_space<vmem>>, %arg6: memref<8x128xf32, #tpu.memory_space<vmem>>, %arg7: memref<8x128xf32, #tpu.memory_space<vmem>>) attributes {dimension_semantics = [#tpu.dimension_semantics<parallel>], iteration_bounds = array<i64: 4>, scalar_prefetch = 0 : i64, scratch_operands = 0 : i64, tpu.core_type = #tpu.core_type<tc>, window_params = [{transform_indices = @transform_0, window_bounds = array<i64: 8, 128>}, {transform_indices = @transform_1, window_bounds = array<i64: 8, 128>}, {pipeline_mode = #tpu.pipeline_mode<synchronous>, transform_indices = @transform_2, window_bounds = array<i64: 128, 128>}, {pipeline_mode = #tpu.pipeline_mode<synchronous>, transform_indices = @transform_3, window_bounds = array<i64: 128, 128>}, {pipeline_mode = #tpu.pipeline_mode<synchronous>, transform_indices = @transform_4, window_bounds = array<i64: 1, 128>}, {transform_indices = @transform_5, window_bounds = array<i64: 8, 128>}, {transform_indices = @transform_6, window_bounds = array<i64: 8, 128>}]} {
    %c0 = arith.constant 0 : index
    %c0_0 = arith.constant 0 : index
    %0 = vector.load %arg1[%c0, %c0_0] : memref<8x128xf32, #tpu.memory_space<vmem>>, vector<8x128xf32>
    %c0_1 = arith.constant 0 : index
    %c0_2 = arith.constant 0 : index
    %1 = vector.load %arg5[%c0_1, %c0_2] : memref<1x128xf32, #tpu.memory_space<vmem>>, vector<1x128xf32>
    %c0_3 = arith.constant 0 : index
    %c0_4 = arith.constant 0 : index
    %2 = vector.load %arg6[%c0_3, %c0_4] : memref<8x128xf32, #tpu.memory_space<vmem>>, vector<8x128xf32>
    %cst = arith.constant 3.125000e-02 : f32
    %3 = vector.broadcast %cst : f32 to vector<8x128xf32>
    %4 = arith.mulf %2, %3 : vector<8x128xf32>
    %c0_5 = arith.constant 0 : index
    %c0_6 = arith.constant 0 : index
    %5 = vector.load %arg3[%c0_5, %c0_6] : memref<128x128xf32, #tpu.memory_space<vmem>>, vector<128x128xf32>
    %6 = arith.truncf %5 : vector<128x128xf32> to vector<128x128xbf16>
    %c0_7 = arith.constant 0 : index
    %c0_8 = arith.constant 0 : index
    %7 = vector.load %arg4[%c0_7, %c0_8] : memref<128x128xf32, #tpu.memory_space<vmem>>, vector<128x128xf32>
    %8 = arith.truncf %7 : vector<128x128xf32> to vector<128x128xbf16>
    %c0_9 = arith.constant 0 : index
    %c0_10 = arith.constant 0 : index
    %9 = vector.load %arg2[%c0_9, %c0_10] : memref<8x128xf32, #tpu.memory_space<vmem>>, vector<8x128xf32>
    %10 = arith.addf %0, %9 : vector<8x128xf32>
    %11 = arith.truncf %10 : vector<8x128xf32> to vector<8x128xbf16>
    %cst_11 = arith.constant dense<0.000000e+00> : vector<8x128xf32>
    %12 = tpu.matmul %11, %6, %cst_11 {dimension_numbers = #tpu.dot_dimension_numbers<[1], [0], [0], [1], [0, 0, 1, 1], [], []>} : vector<8x128xbf16>, vector<128x128xbf16>, vector<8x128xf32> -> vector<8x128xf32>
    %13 = vector.broadcast %1 : vector<1x128xf32> to vector<8x128xf32>
    %14 = arith.addf %12, %13 : vector<8x128xf32>
    %cst_12 = arith.constant dense<0xFF800000> : vector<8xf32>
    %15 = vector.multi_reduction <maximumf>, %14, %cst_12 [1] : vector<8x128xf32> to vector<8xf32>
    %16 = vector.shape_cast %15 : vector<8xf32> to vector<8x1xf32>
    %17 = vector.broadcast %16 : vector<8x1xf32> to vector<8x128xf32>
    %18 = arith.subf %14, %17 : vector<8x128xf32>
    %19 = math.exp %18 : vector<8x128xf32>
    %cst_13 = arith.constant dense<0.000000e+00> : vector<8xf32>
    %20 = vector.multi_reduction <add>, %19, %cst_13 [1] : vector<8x128xf32> to vector<8xf32>
    %21 = vector.shape_cast %20 : vector<8xf32> to vector<8x1xf32>
    %22 = tpu.reciprocal %21 {approx = true} : vector<8x1xf32> -> vector<8x1xf32>
    %cst_14 = arith.constant 3.125000e-02 : f32
    %23 = vector.broadcast %cst_14 : f32 to vector<8x1xf32>
    %24 = arith.mulf %23, %22 : vector<8x1xf32>
    %25 = vector.broadcast %24 : vector<8x1xf32> to vector<8x128xf32>
    %26 = arith.mulf %19, %25 : vector<8x128xf32>
    %27 = arith.subf %26, %4 : vector<8x128xf32>
    %28 = arith.truncf %27 : vector<8x128xf32> to vector<8x128xbf16>
    %cst_15 = arith.constant dense<0.000000e+00> : vector<8x128xf32>
    %29 = tpu.matmul %28, %8, %cst_15 {dimension_numbers = #tpu.dot_dimension_numbers<[1], [0], [0], [1], [0, 0, 1, 1], [], []>} : vector<8x128xbf16>, vector<128x128xbf16>, vector<8x128xf32> -> vector<8x128xf32>
    %cst_16 = arith.constant 4.88281273E-7 : f32
    %30 = vector.broadcast %cst_16 : f32 to vector<8x128xf32>
    %31 = arith.mulf %30, %10 : vector<8x128xf32>
    %32 = arith.addf %29, %31 : vector<8x128xf32>
    %cst_17 = arith.constant 0.000000e+00 : f32
    %33 = vector.broadcast %cst_17 : f32 to vector<8x128xf32>
    %34 = arith.cmpf ogt, %32, %33 : vector<8x128xf32>
    %cst_18 = arith.constant 0.000000e+00 : f32
    %35 = vector.broadcast %cst_18 : f32 to vector<8x128xf32>
    %36 = arith.cmpf olt, %32, %35 : vector<8x128xf32>
    %cst_19 = arith.constant -1.250000e-02 : f32
    %cst_20 = arith.constant 0.000000e+00 : f32
    %37 = vector.broadcast %cst_19 : f32 to vector<8x128xf32>
    %38 = vector.broadcast %cst_20 : f32 to vector<8x128xf32>
    %39 = arith.select %36, %37, %38 : vector<8x128xi1>, vector<8x128xf32>
    %cst_21 = arith.constant 1.250000e-02 : f32
    %40 = vector.broadcast %cst_21 : f32 to vector<8x128xf32>
    %41 = arith.select %34, %40, %39 : vector<8x128xi1>, vector<8x128xf32>
    %42 = arith.addf %9, %41 : vector<8x128xf32>
    %cst_22 = arith.constant -5.000000e-02 : f32
    %cst_23 = arith.constant 5.000000e-02 : f32
    %43 = vector.broadcast %cst_22 : f32 to vector<8x128xf32>
    %44 = arith.maximumf %43, %42 : vector<8x128xf32>
    %45 = vector.broadcast %cst_23 : f32 to vector<8x128xf32>
    %46 = arith.minimumf %45, %44 : vector<8x128xf32>
    %47 = arith.addf %0, %46 : vector<8x128xf32>
    %48 = arith.truncf %47 : vector<8x128xf32> to vector<8x128xbf16>
    %cst_24 = arith.constant dense<0.000000e+00> : vector<8x128xf32>
    %49 = tpu.matmul %48, %6, %cst_24 {dimension_numbers = #tpu.dot_dimension_numbers<[1], [0], [0], [1], [0, 0, 1, 1], [], []>} : vector<8x128xbf16>, vector<128x128xbf16>, vector<8x128xf32> -> vector<8x128xf32>
    %50 = vector.broadcast %1 : vector<1x128xf32> to vector<8x128xf32>
    %51 = arith.addf %49, %50 : vector<8x128xf32>
    %cst_25 = arith.constant dense<0xFF800000> : vector<8xf32>
    %52 = vector.multi_reduction <maximumf>, %51, %cst_25 [1] : vector<8x128xf32> to vector<8xf32>
    %53 = vector.shape_cast %52 : vector<8xf32> to vector<8x1xf32>
    %54 = vector.broadcast %53 : vector<8x1xf32> to vector<8x128xf32>
    %55 = arith.subf %51, %54 : vector<8x128xf32>
    %56 = math.exp %55 : vector<8x128xf32>
    %cst_26 = arith.constant dense<0.000000e+00> : vector<8xf32>
    %57 = vector.multi_reduction <add>, %56, %cst_26 [1] : vector<8x128xf32> to vector<8xf32>
    %58 = vector.shape_cast %57 : vector<8xf32> to vector<8x1xf32>
    %59 = tpu.reciprocal %58 {approx = true} : vector<8x1xf32> -> vector<8x1xf32>
    %cst_27 = arith.constant 3.125000e-02 : f32
    %60 = vector.broadcast %cst_27 : f32 to vector<8x1xf32>
    %61 = arith.mulf %60, %59 : vector<8x1xf32>
    %62 = vector.broadcast %61 : vector<8x1xf32> to vector<8x128xf32>
    %63 = arith.mulf %56, %62 : vector<8x128xf32>
    %64 = arith.subf %63, %4 : vector<8x128xf32>
    %65 = arith.truncf %64 : vector<8x128xf32> to vector<8x128xbf16>
    %cst_28 = arith.constant dense<0.000000e+00> : vector<8x128xf32>
    %66 = tpu.matmul %65, %8, %cst_28 {dimension_numbers = #tpu.dot_dimension_numbers<[1], [0], [0], [1], [0, 0, 1, 1], [], []>} : vector<8x128xbf16>, vector<128x128xbf16>, vector<8x128xf32> -> vector<8x128xf32>
    %cst_29 = arith.constant 4.88281273E-7 : f32
    %67 = vector.broadcast %cst_29 : f32 to vector<8x128xf32>
    %68 = arith.mulf %67, %47 : vector<8x128xf32>
    %69 = arith.addf %66, %68 : vector<8x128xf32>
    %cst_30 = arith.constant 0.000000e+00 : f32
    %70 = vector.broadcast %cst_30 : f32 to vector<8x128xf32>
    %71 = arith.cmpf ogt, %69, %70 : vector<8x128xf32>
    %cst_31 = arith.constant 0.000000e+00 : f32
    %72 = vector.broadcast %cst_31 : f32 to vector<8x128xf32>
    %73 = arith.cmpf olt, %69, %72 : vector<8x128xf32>
    %cst_32 = arith.constant -1.250000e-02 : f32
    %cst_33 = arith.constant 0.000000e+00 : f32
    %74 = vector.broadcast %cst_32 : f32 to vector<8x128xf32>
    %75 = vector.broadcast %cst_33 : f32 to vector<8x128xf32>
    %76 = arith.select %73, %74, %75 : vector<8x128xi1>, vector<8x128xf32>
    %cst_34 = arith.constant 1.250000e-02 : f32
    %77 = vector.broadcast %cst_34 : f32 to vector<8x128xf32>
    %78 = arith.select %71, %77, %76 : vector<8x128xi1>, vector<8x128xf32>
    %79 = arith.addf %46, %78 : vector<8x128xf32>
    %cst_35 = arith.constant -5.000000e-02 : f32
    %cst_36 = arith.constant 5.000000e-02 : f32
    %80 = vector.broadcast %cst_35 : f32 to vector<8x128xf32>
    %81 = arith.maximumf %80, %79 : vector<8x128xf32>
    %82 = vector.broadcast %cst_36 : f32 to vector<8x128xf32>
    %83 = arith.minimumf %82, %81 : vector<8x128xf32>
    %84 = arith.addf %0, %83 : vector<8x128xf32>
    %85 = arith.truncf %84 : vector<8x128xf32> to vector<8x128xbf16>
    %cst_37 = arith.constant dense<0.000000e+00> : vector<8x128xf32>
    %86 = tpu.matmul %85, %6, %cst_37 {dimension_numbers = #tpu.dot_dimension_numbers<[1], [0], [0], [1], [0, 0, 1, 1], [], []>} : vector<8x128xbf16>, vector<128x128xbf16>, vector<8x128xf32> -> vector<8x128xf32>
    %87 = vector.broadcast %1 : vector<1x128xf32> to vector<8x128xf32>
    %88 = arith.addf %86, %87 : vector<8x128xf32>
    %cst_38 = arith.constant dense<0xFF800000> : vector<8xf32>
    %89 = vector.multi_reduction <maximumf>, %88, %cst_38 [1] : vector<8x128xf32> to vector<8xf32>
    %90 = vector.shape_cast %89 : vector<8xf32> to vector<8x1xf32>
    %91 = vector.broadcast %90 : vector<8x1xf32> to vector<8x128xf32>
    %92 = arith.subf %88, %91 : vector<8x128xf32>
    %93 = math.exp %92 : vector<8x128xf32>
    %cst_39 = arith.constant dense<0.000000e+00> : vector<8xf32>
    %94 = vector.multi_reduction <add>, %93, %cst_39 [1] : vector<8x128xf32> to vector<8xf32>
    %95 = vector.shape_cast %94 : vector<8xf32> to vector<8x1xf32>
    %96 = tpu.reciprocal %95 {approx = true} : vector<8x1xf32> -> vector<8x1xf32>
    %cst_40 = arith.constant 3.125000e-02 : f32
    %97 = vector.broadcast %cst_40 : f32 to vector<8x1xf32>
    %98 = arith.mulf %97, %96 : vector<8x1xf32>
    %99 = vector.broadcast %98 : vector<8x1xf32> to vector<8x128xf32>
    %100 = arith.mulf %93, %99 : vector<8x128xf32>
    %101 = arith.subf %100, %4 : vector<8x128xf32>
    %102 = arith.truncf %101 : vector<8x128xf32> to vector<8x128xbf16>
    %cst_41 = arith.constant dense<0.000000e+00> : vector<8x128xf32>
    %103 = tpu.matmul %102, %8, %cst_41 {dimension_numbers = #tpu.dot_dimension_numbers<[1], [0], [0], [1], [0, 0, 1, 1], [], []>} : vector<8x128xbf16>, vector<128x128xbf16>, vector<8x128xf32> -> vector<8x128xf32>
    %cst_42 = arith.constant 4.88281273E-7 : f32
    %104 = vector.broadcast %cst_42 : f32 to vector<8x128xf32>
    %105 = arith.mulf %104, %84 : vector<8x128xf32>
    %106 = arith.addf %103, %105 : vector<8x128xf32>
    %cst_43 = arith.constant 0.000000e+00 : f32
    %107 = vector.broadcast %cst_43 : f32 to vector<8x128xf32>
    %108 = arith.cmpf ogt, %106, %107 : vector<8x128xf32>
    %cst_44 = arith.constant 0.000000e+00 : f32
    %109 = vector.broadcast %cst_44 : f32 to vector<8x128xf32>
    %110 = arith.cmpf olt, %106, %109 : vector<8x128xf32>
    %cst_45 = arith.constant -1.250000e-02 : f32
    %cst_46 = arith.constant 0.000000e+00 : f32
    %111 = vector.broadcast %cst_45 : f32 to vector<8x128xf32>
    %112 = vector.broadcast %cst_46 : f32 to vector<8x128xf32>
    %113 = arith.select %110, %111, %112 : vector<8x128xi1>, vector<8x128xf32>
    %cst_47 = arith.constant 1.250000e-02 : f32
    %114 = vector.broadcast %cst_47 : f32 to vector<8x128xf32>
    %115 = arith.select %108, %114, %113 : vector<8x128xi1>, vector<8x128xf32>
    %116 = arith.addf %83, %115 : vector<8x128xf32>
    %cst_48 = arith.constant -5.000000e-02 : f32
    %cst_49 = arith.constant 5.000000e-02 : f32
    %117 = vector.broadcast %cst_48 : f32 to vector<8x128xf32>
    %118 = arith.maximumf %117, %116 : vector<8x128xf32>
    %119 = vector.broadcast %cst_49 : f32 to vector<8x128xf32>
    %120 = arith.minimumf %119, %118 : vector<8x128xf32>
    %121 = arith.addf %0, %120 : vector<8x128xf32>
    %122 = arith.truncf %121 : vector<8x128xf32> to vector<8x128xbf16>
    %cst_50 = arith.constant dense<0.000000e+00> : vector<8x128xf32>
    %123 = tpu.matmul %122, %6, %cst_50 {dimension_numbers = #tpu.dot_dimension_numbers<[1], [0], [0], [1], [0, 0, 1, 1], [], []>} : vector<8x128xbf16>, vector<128x128xbf16>, vector<8x128xf32> -> vector<8x128xf32>
    %124 = vector.broadcast %1 : vector<1x128xf32> to vector<8x128xf32>
    %125 = arith.addf %123, %124 : vector<8x128xf32>
    %cst_51 = arith.constant dense<0xFF800000> : vector<8xf32>
    %126 = vector.multi_reduction <maximumf>, %125, %cst_51 [1] : vector<8x128xf32> to vector<8xf32>
    %127 = vector.shape_cast %126 : vector<8xf32> to vector<8x1xf32>
    %128 = vector.broadcast %127 : vector<8x1xf32> to vector<8x128xf32>
    %129 = arith.subf %125, %128 : vector<8x128xf32>
    %130 = math.exp %129 : vector<8x128xf32>
    %cst_52 = arith.constant dense<0.000000e+00> : vector<8xf32>
    %131 = vector.multi_reduction <add>, %130, %cst_52 [1] : vector<8x128xf32> to vector<8xf32>
    %132 = vector.shape_cast %131 : vector<8xf32> to vector<8x1xf32>
    %133 = tpu.reciprocal %132 {approx = true} : vector<8x1xf32> -> vector<8x1xf32>
    %cst_53 = arith.constant 3.125000e-02 : f32
    %134 = vector.broadcast %cst_53 : f32 to vector<8x1xf32>
    %135 = arith.mulf %134, %133 : vector<8x1xf32>
    %136 = vector.broadcast %135 : vector<8x1xf32> to vector<8x128xf32>
    %137 = arith.mulf %130, %136 : vector<8x128xf32>
    %138 = arith.subf %137, %4 : vector<8x128xf32>
    %139 = arith.truncf %138 : vector<8x128xf32> to vector<8x128xbf16>
    %cst_54 = arith.constant dense<0.000000e+00> : vector<8x128xf32>
    %140 = tpu.matmul %139, %8, %cst_54 {dimension_numbers = #tpu.dot_dimension_numbers<[1], [0], [0], [1], [0, 0, 1, 1], [], []>} : vector<8x128xbf16>, vector<128x128xbf16>, vector<8x128xf32> -> vector<8x128xf32>
    %cst_55 = arith.constant 4.88281273E-7 : f32
    %141 = vector.broadcast %cst_55 : f32 to vector<8x128xf32>
    %142 = arith.mulf %141, %121 : vector<8x128xf32>
    %143 = arith.addf %140, %142 : vector<8x128xf32>
    %cst_56 = arith.constant 0.000000e+00 : f32
    %144 = vector.broadcast %cst_56 : f32 to vector<8x128xf32>
    %145 = arith.cmpf ogt, %143, %144 : vector<8x128xf32>
    %cst_57 = arith.constant 0.000000e+00 : f32
    %146 = vector.broadcast %cst_57 : f32 to vector<8x128xf32>
    %147 = arith.cmpf olt, %143, %146 : vector<8x128xf32>
    %cst_58 = arith.constant -1.250000e-02 : f32
    %cst_59 = arith.constant 0.000000e+00 : f32
    %148 = vector.broadcast %cst_58 : f32 to vector<8x128xf32>
    %149 = vector.broadcast %cst_59 : f32 to vector<8x128xf32>
    %150 = arith.select %147, %148, %149 : vector<8x128xi1>, vector<8x128xf32>
    %cst_60 = arith.constant 1.250000e-02 : f32
    %151 = vector.broadcast %cst_60 : f32 to vector<8x128xf32>
    %152 = arith.select %145, %151, %150 : vector<8x128xi1>, vector<8x128xf32>
    %153 = arith.addf %120, %152 : vector<8x128xf32>
    %cst_61 = arith.constant -5.000000e-02 : f32
    %cst_62 = arith.constant 5.000000e-02 : f32
    %154 = vector.broadcast %cst_61 : f32 to vector<8x128xf32>
    %155 = arith.maximumf %154, %153 : vector<8x128xf32>
    %156 = vector.broadcast %cst_62 : f32 to vector<8x128xf32>
    %157 = arith.minimumf %156, %155 : vector<8x128xf32>
    %158 = arith.addf %0, %157 : vector<8x128xf32>
    %159 = arith.truncf %158 : vector<8x128xf32> to vector<8x128xbf16>
    %cst_63 = arith.constant dense<0.000000e+00> : vector<8x128xf32>
    %160 = tpu.matmul %159, %6, %cst_63 {dimension_numbers = #tpu.dot_dimension_numbers<[1], [0], [0], [1], [0, 0, 1, 1], [], []>} : vector<8x128xbf16>, vector<128x128xbf16>, vector<8x128xf32> -> vector<8x128xf32>
    %161 = vector.broadcast %1 : vector<1x128xf32> to vector<8x128xf32>
    %162 = arith.addf %160, %161 : vector<8x128xf32>
    %cst_64 = arith.constant dense<0xFF800000> : vector<8xf32>
    %163 = vector.multi_reduction <maximumf>, %162, %cst_64 [1] : vector<8x128xf32> to vector<8xf32>
    %164 = vector.shape_cast %163 : vector<8xf32> to vector<8x1xf32>
    %165 = vector.broadcast %164 : vector<8x1xf32> to vector<8x128xf32>
    %166 = arith.subf %162, %165 : vector<8x128xf32>
    %167 = math.exp %166 : vector<8x128xf32>
    %cst_65 = arith.constant dense<0.000000e+00> : vector<8xf32>
    %168 = vector.multi_reduction <add>, %167, %cst_65 [1] : vector<8x128xf32> to vector<8xf32>
    %169 = vector.shape_cast %168 : vector<8xf32> to vector<8x1xf32>
    %170 = tpu.reciprocal %169 {approx = true} : vector<8x1xf32> -> vector<8x1xf32>
    %cst_66 = arith.constant 3.125000e-02 : f32
    %171 = vector.broadcast %cst_66 : f32 to vector<8x1xf32>
    %172 = arith.mulf %171, %170 : vector<8x1xf32>
    %173 = vector.broadcast %172 : vector<8x1xf32> to vector<8x128xf32>
    %174 = arith.mulf %167, %173 : vector<8x128xf32>
    %175 = arith.subf %174, %4 : vector<8x128xf32>
    %176 = arith.truncf %175 : vector<8x128xf32> to vector<8x128xbf16>
    %cst_67 = arith.constant dense<0.000000e+00> : vector<8x128xf32>
    %177 = tpu.matmul %176, %8, %cst_67 {dimension_numbers = #tpu.dot_dimension_numbers<[1], [0], [0], [1], [0, 0, 1, 1], [], []>} : vector<8x128xbf16>, vector<128x128xbf16>, vector<8x128xf32> -> vector<8x128xf32>
    %cst_68 = arith.constant 4.88281273E-7 : f32
    %178 = vector.broadcast %cst_68 : f32 to vector<8x128xf32>
    %179 = arith.mulf %178, %158 : vector<8x128xf32>
    %180 = arith.addf %177, %179 : vector<8x128xf32>
    %cst_69 = arith.constant 0.000000e+00 : f32
    %181 = vector.broadcast %cst_69 : f32 to vector<8x128xf32>
    %182 = arith.cmpf ogt, %180, %181 : vector<8x128xf32>
    %cst_70 = arith.constant 0.000000e+00 : f32
    %183 = vector.broadcast %cst_70 : f32 to vector<8x128xf32>
    %184 = arith.cmpf olt, %180, %183 : vector<8x128xf32>
    %cst_71 = arith.constant -1.250000e-02 : f32
    %cst_72 = arith.constant 0.000000e+00 : f32
    %185 = vector.broadcast %cst_71 : f32 to vector<8x128xf32>
    %186 = vector.broadcast %cst_72 : f32 to vector<8x128xf32>
    %187 = arith.select %184, %185, %186 : vector<8x128xi1>, vector<8x128xf32>
    %cst_73 = arith.constant 1.250000e-02 : f32
    %188 = vector.broadcast %cst_73 : f32 to vector<8x128xf32>
    %189 = arith.select %182, %188, %187 : vector<8x128xi1>, vector<8x128xf32>
    %190 = arith.addf %157, %189 : vector<8x128xf32>
    %cst_74 = arith.constant -5.000000e-02 : f32
    %cst_75 = arith.constant 5.000000e-02 : f32
    %191 = vector.broadcast %cst_74 : f32 to vector<8x128xf32>
    %192 = arith.maximumf %191, %190 : vector<8x128xf32>
    %193 = vector.broadcast %cst_75 : f32 to vector<8x128xf32>
    %194 = arith.minimumf %193, %192 : vector<8x128xf32>
    %195 = arith.addf %0, %194 : vector<8x128xf32>
    %c0_76 = arith.constant 0 : index
    %c0_77 = arith.constant 0 : index
    %196 = vector.load %arg7[%c0_76, %c0_77] : memref<8x128xf32, #tpu.memory_space<vmem>>, vector<8x128xf32>
    tpu.vector_store %arg7[%c0_76, %c0_77], %195 {strides = array<i32>} : memref<8x128xf32, #tpu.memory_space<vmem>>, vector<8x128xf32>,
    return
  }
  func.func @transform_0(%arg0: i32) -> (i32, i32) {
    %c0_i32 = arith.constant 0 : i32
    %c0_i32_0 = arith.constant 0 : i32
    return %arg0, %c0_i32 : i32, i32
  }
  func.func @transform_1(%arg0: i32) -> (i32, i32) {
    %c0_i32 = arith.constant 0 : i32
    %c0_i32_0 = arith.constant 0 : i32
    return %arg0, %c0_i32 : i32, i32
  }
  func.func @transform_2(%arg0: i32) -> (i32, i32) {
    %c0_i32 = arith.constant 0 : i32
    %c0_i32_0 = arith.constant 0 : i32
    %c0_i32_1 = arith.constant 0 : i32
    return %c0_i32, %c0_i32_0 : i32, i32
  }
  func.func @transform_3(%arg0: i32) -> (i32, i32) {
    %c0_i32 = arith.constant 0 : i32
    %c0_i32_0 = arith.constant 0 : i32
    %c0_i32_1 = arith.constant 0 : i32
    return %c0_i32, %c0_i32_0 : i32, i32
  }
  func.func @transform_4(%arg0: i32) -> (i32, i32) {
    %c0_i32 = arith.constant 0 : i32
    %c0_i32_0 = arith.constant 0 : i32
    %c0_i32_1 = arith.constant 0 : i32
    return %c0_i32, %c0_i32_0 : i32, i32
  }
  func.func @transform_5(%arg0: i32) -> (i32, i32) {
    %c0_i32 = arith.constant 0 : i32
    %c0_i32_0 = arith.constant 0 : i32
    return %arg0, %c0_i32 : i32, i32
  }
  func.func @transform_6(%arg0: i32) -> (i32, i32) {
    %c0_i32 = arith.constant 0 : i32
    %c0_i32_0 = arith.constant 0 : i32
    return %arg0, %c0_i32 : i32, i32
  }
}

</mosaic_0001>

<llo_original>
// kernel: adversarial_feature_augment.1
$region0: #{adversarial_feature_augment.1}
  #allocation0 [shape = 'u32[]', space=smem, size = 0x4, offset = 0x4, fixed_abs, tag = 'smem constant byte address 0x4 - core index']
  #allocation1 [shape = 'u32[144,128]{1,0:T(1,128)}', space=vmem, size = 0x12000, scoped, tag = 'internal scratch']
  %s0 = inlined_call_operand.vmem [shape: f32[32,128], index: 0, kind: input, shape index: {}]
  %s1 = inlined_call_operand.vmem [shape: f32[32,128], index: 1, kind: input, shape index: {}]
  %s2 = inlined_call_operand.vmem [shape: f32[128,128], index: 2, kind: input, shape index: {}]
  %s3 = inlined_call_operand.vmem [shape: f32[128,128], index: 3, kind: input, shape index: {}]
  %s4 = inlined_call_operand.vmem [shape: f32[1,128], index: 4, kind: input, shape index: {}]
  %s5 = inlined_call_operand.vmem [shape: f32[32,128], index: 5, kind: input, shape index: {}]
  %s6 = inlined_call_operand.hbm [shape: f32[32,128], index: 6, kind: output, shape index: {}]
  %s7 = sld [smem:[#allocation0]]
  $region57: #{adversarial_feature_augment.1} parent=0
    _
  %s9 = ssub.s32 1, %s7
  %s10 = scalar_select 0, %s9, %s7
  $region1: #{adversarial_feature_augment.1} parent=0
    #allocation2 [shape = 'u8[8192]{0}', space=vmem, size = 0x2000, scoped, tag = 'output window, operand 0']
    #allocation3 [shape = 's32[2]{0}', space=sflag, size = 0x8, scoped, tag = 'scoped memory for adversarial_feature_augment.1']
    %11 = vsyncpa [#allocation3], 0
    %s12 = scalar_lea.sflag [#allocation3], 1
    %13 = vsyncpa %s12, 0
    loop: start=0, step=1, limit=6
    $region2: #{adversarial_feature_augment.1} parent=1 // loop_pre_header
      _
    $region3: #{adversarial_feature_augment.1} parent=1 // loop_header
      %s15 = sphi 0, %s19
      %p16 = scmp.ge.s32.totalorder %s15, 6
      %s25 = sphi 0, %s27
      %s28 = sphi 0, %s25
      %s29 = sphi 0, %s28
      %s45 = sphi 0, %s29
      %s51 = sphi 0, %s53
      %s54 = sphi 0, %s51
      %s55 = sphi 0, %s54
      %s71 = sphi 0, %s55
      %s75 = sphi 0, %s75
      %s77 = sphi 0, %s75
      %s78 = sphi 0, %s77
      %s92 = sphi 0, %s78
      %s96 = sphi 0, %s96
      %s98 = sphi 0, %s96
      %s99 = sphi 0, %s98
      %s113 = sphi 0, %s99
      %s117 = sphi 0, %s117
      %s119 = sphi 0, %s117
      %s120 = sphi 0, %s119
      %s134 = sphi 0, %s120
      %s140 = sphi 0, %s142
      %s143 = sphi 0, %s140
      %s144 = sphi 0, %s143
      %s160 = sphi 0, %s144
      %s166 = sphi 0, %s168
      %s169 = sphi 0, %s166
      %s170 = sphi 0, %s169
      %s186 = sphi 0, %s170
    $region4: #{adversarial_feature_augment.1} parent=1 // loop_header_branch
      %18 = sbr.rel (%p16) target = $region8
    $region5: #{adversarial_feature_augment.1} parent=1 // loop_body
      %s20 = ssub.s32 %s15, 1
      %s21 = ssub.s32 %s15, 2
      %s22 = sadd.s32 %s15, 1
      %s23 = ssub.s32 %s15, %s22
      %p24 = scmp.eq.s32.totalorder %s23, 0
      %s26 = sadd.s32 %s25, 1
      %s27 = scalar_select %p24, %s25, %s26
      %p30 = pneg %p24
      %p31 = scmp.eq.s32.totalorder %s15, 3
      %p32 = por %p30, %p31
      %p33 = scmp.ne.s32.totalorder %s25, %s28
      %p34 = scmp.eq.s32.totalorder %s15, 0
      %p35 = por %p33, %p34
      %p36 = scmp.ne.s32.totalorder %s25, %s28
      %p37 = scmp.eq.s32.totalorder %s20, 3
      %p38 = por %p36, %p37
      %p39 = scmp.ne.s32.totalorder %s28, %s29
      %p40 = scmp.eq.s32.totalorder %s20, 0
      %p41 = por %p39, %p40
      %p42 = scmp.ne.s32.totalorder %s28, %s29
      %p43 = scmp.eq.s32.totalorder %s21, 3
      %p44 = por %p42, %p43
      %p46 = scmp.ne.s32.totalorder %s29, %s45
      %p47 = scmp.eq.s32.totalorder %s21, 0
      %p48 = por %p46, %p47
      %s49 = ssub.s32 %s15, %s22
      %p50 = scmp.eq.s32.totalorder %s49, 0
      %s52 = sadd.s32 %s51, 1
      %s53 = scalar_select %p50, %s51, %s52
      %p56 = pneg %p50
      %p57 = scmp.eq.s32.totalorder %s15, 3
      %p58 = por %p56, %p57
      %p59 = scmp.ne.s32.totalorder %s51, %s54
      %p60 = scmp.eq.s32.totalorder %s15, 0
      %p61 = por %p59, %p60
      %p62 = scmp.ne.s32.totalorder %s51, %s54
      %p63 = scmp.eq.s32.totalorder %s20, 3
      %p64 = por %p62, %p63
      %p65 = scmp.ne.s32.totalorder %s54, %s55
      %p66 = scmp.eq.s32.totalorder %s20, 0
      %p67 = por %p65, %p66
      %p68 = scmp.ne.s32.totalorder %s54, %s55
      %p69 = scmp.eq.s32.totalorder %s21, 3
      %p70 = por %p68, %p69
      %p72 = scmp.ne.s32.totalorder %s55, %s71
      %p73 = scmp.eq.s32.totalorder %s21, 0
      %p74 = por %p72, %p73
      %s76 = sadd.s32 %s75, 1
      %p79 = scmp.eq.s32.totalorder %s15, 3
      %p80 = scmp.ne.s32.totalorder %s75, %s77
      %p81 = scmp.eq.s32.totalorder %s15, 0
      %p82 = por %p80, %p81
      %p83 = scmp.ne.s32.totalorder %s75, %s77
      %p84 = scmp.eq.s32.totalorder %s20, 3
      %p85 = por %p83, %p84
      %p86 = scmp.ne.s32.totalorder %s77, %s78
      %p87 = scmp.eq.s32.totalorder %s20, 0
      %p88 = por %p86, %p87
      %p89 = scmp.ne.s32.totalorder %s77, %s78
      %p90 = scmp.eq.s32.totalorder %s21, 3
      %p91 = por %p89, %p90
      %p93 = scmp.ne.s32.totalorder %s78, %s92
      %p94 = scmp.eq.s32.totalorder %s21, 0
      %p95 = por %p93, %p94
      %s97 = sadd.s32 %s96, 1
      %p100 = scmp.eq.s32.totalorder %s15, 3
      %p101 = scmp.ne.s32.totalorder %s96, %s98
      %p102 = scmp.eq.s32.totalorder %s15, 0
      %p103 = por %p101, %p102
      %p104 = scmp.ne.s32.totalorder %s96, %s98
      %p105 = scmp.eq.s32.totalorder %s20, 3
      %p106 = por %p104, %p105
      %p107 = scmp.ne.s32.totalorder %s98, %s99
      %p108 = scmp.eq.s32.totalorder %s20, 0
      %p109 = por %p107, %p108
      %p110 = scmp.ne.s32.totalorder %s98, %s99
      %p111 = scmp.eq.s32.totalorder %s21, 3
      %p112 = por %p110, %p111
      %p114 = scmp.ne.s32.totalorder %s99, %s113
      %p115 = scmp.eq.s32.totalorder %s21, 0
      %p116 = por %p114, %p115
      %s118 = sadd.s32 %s117, 1
      %p121 = scmp.eq.s32.totalorder %s15, 3
      %p122 = scmp.ne.s32.totalorder %s117, %s119
      %p123 = scmp.eq.s32.totalorder %s15, 0
      %p124 = por %p122, %p123
      %p125 = scmp.ne.s32.totalorder %s117, %s119
      %p126 = scmp.eq.s32.totalorder %s20, 3
      %p127 = por %p125, %p126
      %p128 = scmp.ne.s32.totalorder %s119, %s120
      %p129 = scmp.eq.s32.totalorder %s20, 0
      %p130 = por %p128, %p129
      %p131 = scmp.ne.s32.totalorder %s119, %s120
      %p132 = scmp.eq.s32.totalorder %s21, 3
      %p133 = por %p131, %p132
      %p135 = scmp.ne.s32.totalorder %s120, %s134
      %p136 = scmp.eq.s32.totalorder %s21, 0
      %p137 = por %p135, %p136
      %s138 = ssub.s32 %s15, %s22
      %p139 = scmp.eq.s32.totalorder %s138, 0
      %s141 = sadd.s32 %s140, 1
      %s142 = scalar_select %p139, %s140, %s141
      %p145 = pneg %p139
      %p146 = scmp.eq.s32.totalorder %s15, 3
      %p147 = por %p145, %p146
      %p148 = scmp.ne.s32.totalorder %s140, %s143
      %p149 = scmp.eq.s32.totalorder %s15, 0
      %p150 = por %p148, %p149
      %p151 = scmp.ne.s32.totalorder %s140, %s143
      %p152 = scmp.eq.s32.totalorder %s20, 3
      %p153 = por %p151, %p152
      %p154 = scmp.ne.s32.totalorder %s143, %s144
      %p155 = scmp.eq.s32.totalorder %s20, 0
      %p156 = por %p154, %p155
      %p157 = scmp.ne.s32.totalorder %s143, %s144
      %p158 = scmp.eq.s32.totalorder %s21, 3
      %p159 = por %p157, %p158
      %p161 = scmp.ne.s32.totalorder %s144, %s160
      %p162 = scmp.eq.s32.totalorder %s21, 0
      %p163 = por %p161, %p162
      %s164 = ssub.s32 %s15, %s22
      %p165 = scmp.eq.s32.totalorder %s164, 0
      %s167 = sadd.s32 %s166, 1
      %s168 = scalar_select %p165, %s166, %s167
      %p171 = pneg %p165
      %p172 = scmp.eq.s32.totalorder %s15, 3
      %p173 = por %p171, %p172
      %p174 = scmp.ne.s32.totalorder %s166, %s169
      %p175 = scmp.eq.s32.totalorder %s15, 0
      %p176 = por %p174, %p175
      %p177 = scmp.ne.s32.totalorder %s166, %s169
      %p178 = scmp.eq.s32.totalorder %s20, 3
      %p179 = por %p177, %p178
      %p180 = scmp.ne.s32.totalorder %s169, %s170
      %p181 = scmp.eq.s32.totalorder %s20, 0
      %p182 = por %p180, %p181
      %p183 = scmp.ne.s32.totalorder %s169, %s170
      %p184 = scmp.eq.s32.totalorder %s21, 3
      %p185 = por %p183, %p184
      %p187 = scmp.ne.s32.totalorder %s170, %s186
      %p188 = scmp.eq.s32.totalorder %s21, 0
      %p189 = por %p187, %p188
      %p190 = scmp.le.s32.totalorder 1, %s15
      %p191 = scmp.lt.s32.totalorder %s15, 5
      %p192 = pnand %p190, %p191
      %p193 = pneg %p192
      // Predicated region
      $region9: #{adversarial_feature_augment.1} parent=5 // pred_check
        _
      $region10: #{adversarial_feature_augment.1} parent=5 // pred_check_branch
        %195 = sbr.rel (%p192) target = $region12
      $region11: #{adversarial_feature_augment.1} parent=5 // pred_region
        %s196 = ssub.s32 %s15, 1
        // Predicated region
        $region13: #{adversarial_feature_augment.1} parent=11 // pred_check
          %p197 = pneg %p88
        $region14: #{adversarial_feature_augment.1} parent=11 // pred_check_branch
          %199 = sbr.rel (%p197) target = $region16
        $region15: #{adversarial_feature_augment.1} parent=11 // pred_region
          _
        $region16: #{adversarial_feature_augment.1} parent=11 // pred_fallthru
          _
        // Predicated region
        $region17: #{adversarial_feature_augment.1} parent=11 // pred_check
          %p200 = pneg %p109
        $region18: #{adversarial_feature_augment.1} parent=11 // pred_check_branch
          %202 = sbr.rel (%p200) target = $region20
        $region19: #{adversarial_feature_augment.1} parent=11 // pred_region
          _
        $region20: #{adversarial_feature_augment.1} parent=11 // pred_fallthru
          _
        // Predicated region
        $region21: #{adversarial_feature_augment.1} parent=11 // pred_check
          %p203 = pneg %p130
        $region22: #{adversarial_feature_augment.1} parent=11 // pred_check_branch
          %205 = sbr.rel (%p203) target = $region24
        $region23: #{adversarial_feature_augment.1} parent=11 // pred_region
          _
        $region24: #{adversarial_feature_augment.1} parent=11 // pred_fallthru
          _
      $region12: #{adversarial_feature_augment.1} parent=5 // pred_fallthru
        _
      %p206 = scmp.lt.s32.totalorder %s15, 4
      // Predicated region
      $region25: #{adversarial_feature_augment.1} parent=5 // pred_check
        %p207 = pneg %p206
      $region26: #{adversarial_feature_augment.1} parent=5 // pred_check_branch
        %209 = sbr.rel (%p207) target = $region28
      $region27: #{adversarial_feature_augment.1} parent=5 // pred_region
        // Predicated region
        $region29: #{adversarial_feature_augment.1} parent=27 // pred_check
          %p210 = pneg %p35
        $region30: #{adversarial_feature_augment.1} parent=27 // pred_check_branch
          %212 = sbr.rel (%p210) target = $region32
        $region31: #{adversarial_feature_augment.1} parent=27 // pred_region
          %p213 = scmp.lt.s32.totalorder %s15, 3
          %s214 = scalar_select %p213, %s15, 3
          %s215 = smul.addr %s214, 8
          %s216 = scalar_lea.vmem %s0, %s215
        $region32: #{adversarial_feature_augment.1} parent=27 // pred_fallthru
          _
        // Predicated region
        $region33: #{adversarial_feature_augment.1} parent=27 // pred_check
          %p217 = pneg %p61
        $region34: #{adversarial_feature_augment.1} parent=27 // pred_check_branch
          %219 = sbr.rel (%p217) target = $region36
        $region35: #{adversarial_feature_augment.1} parent=27 // pred_region
          %p220 = scmp.lt.s32.totalorder %s15, 3
          %s221 = scalar_select %p220, %s15, 3
          %s222 = smul.addr %s221, 8
          %s223 = scalar_lea.vmem %s1, %s222
        $region36: #{adversarial_feature_augment.1} parent=27 // pred_fallthru
          _
        // Predicated region
        $region37: #{adversarial_feature_augment.1} parent=27 // pred_check
          %p224 = pneg %p150
        $region38: #{adversarial_feature_augment.1} parent=27 // pred_check_branch
          %226 = sbr.rel (%p224) target = $region40
        $region39: #{adversarial_feature_augment.1} parent=27 // pred_region
          %p227 = scmp.lt.s32.totalorder %s15, 3
          %s228 = scalar_select %p227, %s15, 3
          %s229 = smul.addr %s228, 8
          %s230 = scalar_lea.vmem %s5, %s229
        $region40: #{adversarial_feature_augment.1} parent=27 // pred_fallthru
          _
      $region28: #{adversarial_feature_augment.1} parent=5 // pred_fallthru
        _
      %p231 = scmp.le.s32.totalorder 1, %s15
      %p232 = scmp.lt.s32.totalorder %s15, 5
      %p233 = pnand %p231, %p232
      %p234 = pneg %p233
      // Predicated region
      $region41: #{adversarial_feature_augment.1} parent=5 // pred_check
        _
      $region42: #{adversarial_feature_augment.1} parent=5 // pred_check_branch
        %236 = sbr.rel (%p233) target = $region44
      $region43: #{adversarial_feature_augment.1} parent=5 // pred_region
        %s237 = ssub.s32 %s15, 1
        %p238 = scmp.lt.s32.totalorder %s20, 3
        %s239 = scalar_select %p238, %s20, 3
        %s240 = smul.addr %s239, 8
        %s241 = scalar_lea.vmem %s0, %s240
        %p242 = pneg %p41
        %p243 = pneg %p38
        %p244 = scmp.lt.s32.totalorder %s20, 3
        %s245 = scalar_select %p244, %s20, 3
        %s246 = smul.addr %s245, 8
        %s247 = scalar_lea.vmem %s1, %s246
        %p248 = pneg %p67
        %p249 = pneg %p64
        %p250 = pneg %p88
        %p251 = pneg %p85
        %p252 = pneg %p109
        %p253 = pneg %p106
        %p254 = pneg %p130
        %p255 = pneg %p127
        %p256 = scmp.lt.s32.totalorder %s20, 3
        %s257 = scalar_select %p256, %s20, 3
        %s258 = smul.addr %s257, 8
        %s259 = scalar_lea.vmem %s5, %s258
        %p260 = pneg %p156
        %p261 = pneg %p153
        %p262 = pneg %p182
        %p263 = pneg %p179
        %s264 = sand.u32 %s169, 1
        %s265 = scalar_lea.sflag [#allocation3], %s264
        %s266 = sand.u32 %s169, 1
        %s267 = smul.addr %s266, 8
        %s268 = scalar_lea.vmem [#allocation2], %s267
        %p269 = scmp.lt.s32.totalorder %s20, 3
        %s270 = scalar_select %p269, %s20, 3
        %s271 = smul.addr %s270, 8
        %s272 = scalar_lea.vmem %s0, %s271
        %p273 = scmp.lt.s32.totalorder %s20, 3
        %s274 = scalar_select %p273, %s20, 3
        %s275 = smul.addr %s274, 8
        %s276 = scalar_lea.vmem %s1, %s275
        %p277 = scmp.lt.s32.totalorder %s20, 3
        %s278 = scalar_select %p277, %s20, 3
        %s279 = smul.addr %s278, 8
        %s280 = scalar_lea.vmem %s5, %s279
        %v282 = vld [vmem:[%s272] sm:$0xff]
        %v283 = vld [vmem:[%s4] sm:$0x1]
        %v284 = vld [vmem:[%s280] sm:$0xff]
        %v285 = vmul.f32 %v284, 0.03125
        %v286 = vld [vmem:[%s2] sm:$0xff]
        %v287 = vld [vmem:[%s2 + $0x8] sm:$0xff]
        %v288 = vld [vmem:[%s2 + $0x10] sm:$0xff]
        %v289 = vld [vmem:[%s2 + $0x18] sm:$0xff]
        %v290 = vld [vmem:[%s2 + $0x20] sm:$0xff]
        %v291 = vld [vmem:[%s2 + $0x28] sm:$0xff]
        %v292 = vld [vmem:[%s2 + $0x30] sm:$0xff]
        %v293 = vld [vmem:[%s2 + $0x38] sm:$0xff]
        %v294 = vld [vmem:[%s2 + $0x40] sm:$0xff]
        %v295 = vld [vmem:[%s2 + $0x48] sm:$0xff]
        %v296 = vld [vmem:[%s2 + $0x50] sm:$0xff]
        %v297 = vld [vmem:[%s2 + $0x58] sm:$0xff]
        %v298 = vld [vmem:[%s2 + $0x60] sm:$0xff]
        %v299 = vld [vmem:[%s2 + $0x68] sm:$0xff]
        %v300 = vld [vmem:[%s2 + $0x70] sm:$0xff]
        %v301 = vld [vmem:[%s2 + $0x78] sm:$0xff]
        %v302 = vpack.c.bf16 %v287, %v286
        %v303 = vpack.c.bf16 %v289, %v288
        %v304 = vpack.c.bf16 %v291, %v290
        %v305 = vpack.c.bf16 %v293, %v292
        %v306 = vpack.c.bf16 %v295, %v294
        %v307 = vpack.c.bf16 %v297, %v296
        %v308 = vpack.c.bf16 %v299, %v298
        %v309 = vpack.c.bf16 %v301, %v300
        %v310 = vld [vmem:[%s3] sm:$0xff]
        %v311 = vld [vmem:[%s3 + $0x8] sm:$0xff]
        %v312 = vld [vmem:[%s3 + $0x10] sm:$0xff]
        %v313 = vld [vmem:[%s3 + $0x18] sm:$0xff]
        %v314 = vld [vmem:[%s3 + $0x20] sm:$0xff]
        %v315 = vld [vmem:[%s3 + $0x28] sm:$0xff]
        %v316 = vld [vmem:[%s3 + $0x30] sm:$0xff]
        %v317 = vld [vmem:[%s3 + $0x38] sm:$0xff]
        %v318 = vld [vmem:[%s3 + $0x40] sm:$0xff]
        %v319 = vld [vmem:[%s3 + $0x48] sm:$0xff]
        %v320 = vld [vmem:[%s3 + $0x50] sm:$0xff]
        %v321 = vld [vmem:[%s3 + $0x58] sm:$0xff]
        %v322 = vld [vmem:[%s3 + $0x60] sm:$0xff]
        %v323 = vld [vmem:[%s3 + $0x68] sm:$0xff]
        %v324 = vld [vmem:[%s3 + $0x70] sm:$0xff]
        %v325 = vld [vmem:[%s3 + $0x78] sm:$0xff]
        %v326 = vpack.c.bf16 %v311, %v310
        %v327 = vpack.c.bf16 %v313, %v312
        %v328 = vpack.c.bf16 %v315, %v314
        %v329 = vpack.c.bf16 %v317, %v316
        %v330 = vpack.c.bf16 %v319, %v318
        %v331 = vpack.c.bf16 %v321, %v320
        %v332 = vpack.c.bf16 %v323, %v322
        %v333 = vpack.c.bf16 %v325, %v324
        %v334 = vld [vmem:[%s276] sm:$0xff]
        %v335 = vadd.f32 %v282, %v334
        %v336 = vpack.c.bf16 %v335, %v335
        %v338 = vlaneseq
        %v339 = vshrl.u32 %v338, 7
        %v340 = vsub.s32 0, %v339
        %v341 = vrot.slane %v283, %v340
        %343 = vmatprep.subr.bf16.mxu0 0
        %344 = vmatpush1.bf16.msra.mxu0 %v302
        %345 = vmatprep.subr.bf16.mxu0 0
        %346 = vmatpush1.bf16.msra.mxu0 %v303
        %347 = vmatprep.subr.bf16.mxu0 0
        %348 = vmatpush1.bf16.msra.mxu0 %v304
        %349 = vmatprep.subr.bf16.mxu0 0
        %350 = vmatpush1.bf16.msra.mxu0 %v305
        %351 = vmatprep.subr.bf16.mxu0 0
        %352 = vmatpush1.bf16.msra.mxu0 %v306
        %353 = vmatprep.subr.bf16.mxu0 0
        %354 = vmatpush1.bf16.msra.mxu0 %v307
        %355 = vmatprep.subr.bf16.mxu0 0
        %356 = vmatpush1.bf16.msra.mxu0 %v308
        %357 = vmatprep.subr.bf16.mxu0 0
        %358 = vmatpush1.bf16.msra.mxu0 %v309
        %359 = vmatprep.subr.bf16.mxu0 0
        %360 = vmatpush1.bf16.msra.mxu0 0
        %361 = vmatprep.subr.bf16.mxu0 0
        %362 = vmatpush1.bf16.msra.mxu0 0
        %363 = vmatprep.subr.bf16.mxu0 0
        %364 = vmatpush1.bf16.msra.mxu0 0
        %365 = vmatprep.subr.bf16.mxu0 0
        %366 = vmatpush1.bf16.msra.mxu0 0
        %367 = vmatprep.subr.bf16.mxu0 0
        %368 = vmatpush1.bf16.msra.mxu0 0
        %369 = vmatprep.subr.bf16.mxu0 0
        %370 = vmatpush1.bf16.msra.mxu0 0
        %371 = vmatprep.subr.bf16.mxu0 0
        %372 = vmatpush1.bf16.msra.mxu0 0
        %373 = vmatprep.subr.bf16.mxu0 0
        %374 = vmatpush1.bf16.msra.mxu0 0
        %375 = vmatprep.mubr.bf16.mxu0 0
        %376 = vmatmul.mubr.bf16.gmra.mrb[0].mxu0 %v336
        %v377 = vpop.f32.mrb[0].mxu0
        %v378 = vadd.f32 %v341, %v377
        %v379 = vpop.f32.mrb[0].mxu0
        %v380 = vpop.f32.mrb[0].mxu0
        %v381 = vpop.f32.mrb[0].mxu0
        %382 = vdwg.mxu0
        %383 = vmax.xlane.f32.xlu0 %v378
        %v384 = vpop.xlane.xlu0 %383
        %v385 = vsub.f32 %v378, %v384
        %v386 = vmul.f32 %v385, 1.442695
        %v387 = vpow.pop %v386
        %388 = vadd.xlane.f32.xlu0 %v387
        %v389 = vpop.xlane.xlu0 %388
        %v390 = vrcp.pop %v389
        %v391 = vmul.f32 %v390, 0.03125
        %v392 = vmul.f32 %v387, %v391
        %v393 = vsub.f32 %v392, %v285
        %v394 = vpack.c.bf16 %v393, %v393
        %v395 = vmul.f32 %v335, 4.882813e-07
        %396 = vmatprep.subr.bf16.mxu0 0
        %397 = vmatpush1.bf16.msra.mxu0 %v326
        %398 = vmatprep.subr.bf16.mxu0 0
        %399 = vmatpush1.bf16.msra.mxu0 %v327
        %400 = vmatprep.subr.bf16.mxu0 0
        %401 = vmatpush1.bf16.msra.mxu0 %v328
        %402 = vmatprep.subr.bf16.mxu0 0
        %403 = vmatpush1.bf16.msra.mxu0 %v329
        %404 = vmatprep.subr.bf16.mxu0 0
        %405 = vmatpush1.bf16.msra.mxu0 %v330
        %406 = vmatprep.subr.bf16.mxu0 0
        %407 = vmatpush1.bf16.msra.mxu0 %v331
        %408 = vmatprep.subr.bf16.mxu0 0
        %409 = vmatpush1.bf16.msra.mxu0 %v332
        %410 = vmatprep.subr.bf16.mxu0 0
        %411 = vmatpush1.bf16.msra.mxu0 %v333
        %412 = vmatprep.subr.bf16.mxu0 0
        %413 = vmatpush1.bf16.msra.mxu0 0
        %414 = vmatprep.subr.bf16.mxu0 0
        %415 = vmatpush1.bf16.msra.mxu0 0
        %416 = vmatprep.subr.bf16.mxu0 0
        %417 = vmatpush1.bf16.msra.mxu0 0
        %418 = vmatprep.subr.bf16.mxu0 0
        %419 = vmatpush1.bf16.msra.mxu0 0
        %420 = vmatprep.subr.bf16.mxu0 0
        %421 = vmatpush1.bf16.msra.mxu0 0
        %422 = vmatprep.subr.bf16.mxu0 0
        %423 = vmatpush1.bf16.msra.mxu0 0
        %424 = vmatprep.subr.bf16.mxu0 0
        %425 = vmatpush1.bf16.msra.mxu0 0
        %426 = vmatprep.subr.bf16.mxu0 0
        %427 = vmatpush1.bf16.msra.mxu0 0
        %428 = vmatprep.mubr.bf16.mxu0 0
        %429 = vmatmul.mubr.bf16.gmra.mrb[0].mxu0 %v394
        %v430 = vpop.f32.mrb[0].mxu0
        %v431 = vadd.f32 %v395, %v430
        %v432 = vpop.f32.mrb[0].mxu0
        %v433 = vpop.f32.mrb[0].mxu0
        %v434 = vpop.f32.mrb[0].mxu0
        %435 = vdwg.mxu0
        %vm436 = vcmp.gt.f32.partialorder %v431, 0.0
        %vm437 = vcmp.lt.f32.partialorder %v431, 0.0
        %v438 = vsel %vm437, -0.0125, 0.0
        %v439 = vsel %vm436, 0.0125, %v438
        %v440 = vadd.f32 %v334, %v439
        %v441 = vmax.f32 %v440, -0.05
        %v442 = vmin.f32 %v441, 0.05
        %v443 = vadd.f32 %v282, %v442
        %v444 = vpack.c.bf16 %v443, %v443
        %445 = vmatprep.subr.bf16.mxu0 0
        %446 = vmatpush1.bf16.msra.mxu0 %v302
        %447 = vmatprep.subr.bf16.mxu0 0
        %448 = vmatpush1.bf16.msra.mxu0 %v303
        %449 = vmatprep.subr.bf16.mxu0 0
        %450 = vmatpush1.bf16.msra.mxu0 %v304
        %451 = vmatprep.subr.bf16.mxu0 0
        %452 = vmatpush1.bf16.msra.mxu0 %v305
        %453 = vmatprep.subr.bf16.mxu0 0
        %454 = vmatpush1.bf16.msra.mxu0 %v306
        %455 = vmatprep.subr.bf16.mxu0 0
        %456 = vmatpush1.bf16.msra.mxu0 %v307
        %457 = vmatprep.subr.bf16.mxu0 0
        %458 = vmatpush1.bf16.msra.mxu0 %v308
        %459 = vmatprep.subr.bf16.mxu0 0
        %460 = vmatpush1.bf16.msra.mxu0 %v309
        %461 = vmatprep.subr.bf16.mxu0 0
        %462 = vmatpush1.bf16.msra.mxu0 0
        %463 = vmatprep.subr.bf16.mxu0 0
        %464 = vmatpush1.bf16.msra.mxu0 0
        %465 = vmatprep.subr.bf16.mxu0 0
        %466 = vmatpush1.bf16.msra.mxu0 0
        %467 = vmatprep.subr.bf16.mxu0 0
        %468 = vmatpush1.bf16.msra.mxu0 0
        %469 = vmatprep.subr.bf16.mxu0 0
        %470 = vmatpush1.bf16.msra.mxu0 0
        %471 = vmatprep.subr.bf16.mxu0 0
        %472 = vmatpush1.bf16.msra.mxu0 0
        %473 = vmatprep.subr.bf16.mxu0 0
        %474 = vmatpush1.bf16.msra.mxu0 0
        %475 = vmatprep.subr.bf16.mxu0 0
        %476 = vmatpush1.bf16.msra.mxu0 0
        %477 = vmatprep.mubr.bf16.mxu0 0
        %478 = vmatmul.mubr.bf16.gmra.mrb[0].mxu0 %v444
        %v479 = vpop.f32.mrb[0].mxu0
        %v480 = vadd.f32 %v341, %v479
        %v481 = vpop.f32.mrb[0].mxu0
        %v482 = vpop.f32.mrb[0].mxu0
        %v483 = vpop.f32.mrb[0].mxu0
        %484 = vdwg.mxu0
        %485 = vmax.xlane.f32.xlu0 %v480
        %v486 = vpop.xlane.xlu0 %485
        %v487 = vsub.f32 %v480, %v486
        %v488 = vmul.f32 %v487, 1.442695
        %v489 = vpow.pop %v488
        %490 = vadd.xlane.f32.xlu0 %v489
        %v491 = vpop.xlane.xlu0 %490
        %v492 = vrcp.pop %v491
        %v493 = vmul.f32 %v492, 0.03125
        %v494 = vmul.f32 %v489, %v493
        %v495 = vsub.f32 %v494, %v285
        %v496 = vpack.c.bf16 %v495, %v495
        %v497 = vmul.f32 %v443, 4.882813e-07
        %498 = vmatprep.subr.bf16.mxu0 0
        %499 = vmatpush1.bf16.msra.mxu0 %v326
        %500 = vmatprep.subr.bf16.mxu0 0
        %501 = vmatpush1.bf16.msra.mxu0 %v327
        %502 = vmatprep.subr.bf16.mxu0 0
        %503 = vmatpush1.bf16.msra.mxu0 %v328
        %504 = vmatprep.subr.bf16.mxu0 0
        %505 = vmatpush1.bf16.msra.mxu0 %v329
        %506 = vmatprep.subr.bf16.mxu0 0
        %507 = vmatpush1.bf16.msra.mxu0 %v330
        %508 = vmatprep.subr.bf16.mxu0 0
        %509 = vmatpush1.bf16.msra.mxu0 %v331
        %510 = vmatprep.subr.bf16.mxu0 0
        %511 = vmatpush1.bf16.msra.mxu0 %v332
        %512 = vmatprep.subr.bf16.mxu0 0
        %513 = vmatpush1.bf16.msra.mxu0 %v333
        %514 = vmatprep.subr.bf16.mxu0 0
        %515 = vmatpush1.bf16.msra.mxu0 0
        %516 = vmatprep.subr.bf16.mxu0 0
        %517 = vmatpush1.bf16.msra.mxu0 0
        %518 = vmatprep.subr.bf16.mxu0 0
        %519 = vmatpush1.bf16.msra.mxu0 0
        %520 = vmatprep.subr.bf16.mxu0 0
        %521 = vmatpush1.bf16.msra.mxu0 0
        %522 = vmatprep.subr.bf16.mxu0 0
        %523 = vmatpush1.bf16.msra.mxu0 0
        %524 = vmatprep.subr.bf16.mxu0 0
        %525 = vmatpush1.bf16.msra.mxu0 0
        %526 = vmatprep.subr.bf16.mxu0 0
        %527 = vmatpush1.bf16.msra.mxu0 0
        %528 = vmatprep.subr.bf16.mxu0 0
        %529 = vmatpush1.bf16.msra.mxu0 0
        %530 = vmatprep.mubr.bf16.mxu0 0
        %531 = vmatmul.mubr.bf16.gmra.mrb[0].mxu0 %v496
        %v532 = vpop.f32.mrb[0].mxu0
        %v533 = vadd.f32 %v497, %v532
        %v534 = vpop.f32.mrb[0].mxu0
        %v535 = vpop.f32.mrb[0].mxu0
        %v536 = vpop.f32.mrb[0].mxu0
        %537 = vdwg.mxu0
        %vm538 = vcmp.gt.f32.partialorder %v533, 0.0
        %vm539 = vcmp.lt.f32.partialorder %v533, 0.0
        %v540 = vsel %vm539, -0.0125, 0.0
        %v541 = vsel %vm538, 0.0125, %v540
        %v542 = vadd.f32 %v442, %v541
        %v543 = vmax.f32 %v542, -0.05
        %v544 = vmin.f32 %v543, 0.05
        %v545 = vadd.f32 %v282, %v544
        %v546 = vpack.c.bf16 %v545, %v545
        %547 = vmatprep.subr.bf16.mxu0 0
        %548 = vmatpush1.bf16.msra.mxu0 %v302
        %549 = vmatprep.subr.bf16.mxu0 0
        %550 = vmatpush1.bf16.msra.mxu0 %v303
        %551 = vmatprep.subr.bf16.mxu0 0
        %552 = vmatpush1.bf16.msra.mxu0 %v304
        %553 = vmatprep.subr.bf16.mxu0 0
        %554 = vmatpush1.bf16.msra.mxu0 %v305
        %555 = vmatprep.subr.bf16.mxu0 0
        %556 = vmatpush1.bf16.msra.mxu0 %v306
        %557 = vmatprep.subr.bf16.mxu0 0
        %558 = vmatpush1.bf16.msra.mxu0 %v307
        %559 = vmatprep.subr.bf16.mxu0 0
        %560 = vmatpush1.bf16.msra.mxu0 %v308
        %561 = vmatprep.subr.bf16.mxu0 0
        %562 = vmatpush1.bf16.msra.mxu0 %v309
        %563 = vmatprep.subr.bf16.mxu0 0
        %564 = vmatpush1.bf16.msra.mxu0 0
        %565 = vmatprep.subr.bf16.mxu0 0
        %566 = vmatpush1.bf16.msra.mxu0 0
        %567 = vmatprep.subr.bf16.mxu0 0
        %568 = vmatpush1.bf16.msra.mxu0 0
        %569 = vmatprep.subr.bf16.mxu0 0
        %570 = vmatpush1.bf16.msra.mxu0 0
        %571 = vmatprep.subr.bf16.mxu0 0
        %572 = vmatpush1.bf16.msra.mxu0 0
        %573 = vmatprep.subr.bf16.mxu0 0
        %574 = vmatpush1.bf16.msra.mxu0 0
        %575 = vmatprep.subr.bf16.mxu0 0
        %576 = vmatpush1.bf16.msra.mxu0 0
        %577 = vmatprep.subr.bf16.mxu0 0
        %578 = vmatpush1.bf16.msra.mxu0 0
        %579 = vmatprep.mubr.bf16.mxu0 0
        %580 = vmatmul.mubr.bf16.gmra.mrb[0].mxu0 %v546
        %v581 = vpop.f32.mrb[0].mxu0
        %v582 = vadd.f32 %v341, %v581
        %v583 = vpop.f32.mrb[0].mxu0
        %v584 = vpop.f32.mrb[0].mxu0
        %v585 = vpop.f32.mrb[0].mxu0
        %586 = vdwg.mxu0
        %587 = vmax.xlane.f32.xlu0 %v582
        %v588 = vpop.xlane.xlu0 %587
        %v589 = vsub.f32 %v582, %v588
        %v590 = vmul.f32 %v589, 1.442695
        %v591 = vpow.pop %v590
        %592 = vadd.xlane.f32.xlu0 %v591
        %v593 = vpop.xlane.xlu0 %592
        %v594 = vrcp.pop %v593
        %v595 = vmul.f32 %v594, 0.03125
        %v596 = vmul.f32 %v591, %v595
        %v597 = vsub.f32 %v596, %v285
        %v598 = vpack.c.bf16 %v597, %v597
        %v599 = vmul.f32 %v545, 4.882813e-07
        %600 = vmatprep.subr.bf16.mxu0 0
        %601 = vmatpush1.bf16.msra.mxu0 %v326
        %602 = vmatprep.subr.bf16.mxu0 0
        %603 = vmatpush1.bf16.msra.mxu0 %v327
        %604 = vmatprep.subr.bf16.mxu0 0
        %605 = vmatpush1.bf16.msra.mxu0 %v328
        %606 = vmatprep.subr.bf16.mxu0 0
        %607 = vmatpush1.bf16.msra.mxu0 %v329
        %608 = vmatprep.subr.bf16.mxu0 0
        %609 = vmatpush1.bf16.msra.mxu0 %v330
        %610 = vmatprep.subr.bf16.mxu0 0
        %611 = vmatpush1.bf16.msra.mxu0 %v331
        %612 = vmatprep.subr.bf16.mxu0 0
        %613 = vmatpush1.bf16.msra.mxu0 %v332
        %614 = vmatprep.subr.bf16.mxu0 0
        %615 = vmatpush1.bf16.msra.mxu0 %v333
        %616 = vmatprep.subr.bf16.mxu0 0
        %617 = vmatpush1.bf16.msra.mxu0 0
        %618 = vmatprep.subr.bf16.mxu0 0
        %619 = vmatpush1.bf16.msra.mxu0 0
        %620 = vmatprep.subr.bf16.mxu0 0
        %621 = vmatpush1.bf16.msra.mxu0 0
        %622 = vmatprep.subr.bf16.mxu0 0
        %623 = vmatpush1.bf16.msra.mxu0 0
        %624 = vmatprep.subr.bf16.mxu0 0
        %625 = vmatpush1.bf16.msra.mxu0 0
        %626 = vmatprep.subr.bf16.mxu0 0
        %627 = vmatpush1.bf16.msra.mxu0 0
        %628 = vmatprep.subr.bf16.mxu0 0
        %629 = vmatpush1.bf16.msra.mxu0 0
        %630 = vmatprep.subr.bf16.mxu0 0
        %631 = vmatpush1.bf16.msra.mxu0 0
        %632 = vmatprep.mubr.bf16.mxu0 0
        %633 = vmatmul.mubr.bf16.gmra.mrb[0].mxu0 %v598
        %v634 = vpop.f32.mrb[0].mxu0
        %v635 = vadd.f32 %v599, %v634
        %v636 = vpop.f32.mrb[0].mxu0
        %v637 = vpop.f32.mrb[0].mxu0
        %v638 = vpop.f32.mrb[0].mxu0
        %639 = vdwg.mxu0
        %vm640 = vcmp.gt.f32.partialorder %v635, 0.0
        %vm641 = vcmp.lt.f32.partialorder %v635, 0.0
        %v642 = vsel %vm641, -0.0125, 0.0
        %v643 = vsel %vm640, 0.0125, %v642
        %v644 = vadd.f32 %v544, %v643
        %v645 = vmax.f32 %v644, -0.05
        %v646 = vmin.f32 %v645, 0.05
        %v647 = vadd.f32 %v282, %v646
        %v648 = vpack.c.bf16 %v647, %v647
        %649 = vmatprep.subr.bf16.mxu0 0
        %650 = vmatpush1.bf16.msra.mxu0 %v302
        %651 = vmatprep.subr.bf16.mxu0 0
        %652 = vmatpush1.bf16.msra.mxu0 %v303
        %653 = vmatprep.subr.bf16.mxu0 0
        %654 = vmatpush1.bf16.msra.mxu0 %v304
        %655 = vmatprep.subr.bf16.mxu0 0
        %656 = vmatpush1.bf16.msra.mxu0 %v305
        %657 = vmatprep.subr.bf16.mxu0 0
        %658 = vmatpush1.bf16.msra.mxu0 %v306
        %659 = vmatprep.subr.bf16.mxu0 0
        %660 = vmatpush1.bf16.msra.mxu0 %v307
        %661 = vmatprep.subr.bf16.mxu0 0
        %662 = vmatpush1.bf16.msra.mxu0 %v308
        %663 = vmatprep.subr.bf16.mxu0 0
        %664 = vmatpush1.bf16.msra.mxu0 %v309
        %665 = vmatprep.subr.bf16.mxu0 0
        %666 = vmatpush1.bf16.msra.mxu0 0
        %667 = vmatprep.subr.bf16.mxu0 0
        %668 = vmatpush1.bf16.msra.mxu0 0
        %669 = vmatprep.subr.bf16.mxu0 0
        %670 = vmatpush1.bf16.msra.mxu0 0
        %671 = vmatprep.subr.bf16.mxu0 0
        %672 = vmatpush1.bf16.msra.mxu0 0
        %673 = vmatprep.subr.bf16.mxu0 0
        %674 = vmatpush1.bf16.msra.mxu0 0
        %675 = vmatprep.subr.bf16.mxu0 0
        %676 = vmatpush1.bf16.msra.mxu0 0
        %677 = vmatprep.subr.bf16.mxu0 0
        %678 = vmatpush1.bf16.msra.mxu0 0
        %679 = vmatprep.subr.bf16.mxu0 0
        %680 = vmatpush1.bf16.msra.mxu0 0
        %681 = vmatprep.mubr.bf16.mxu0 0
        %682 = vmatmul.mubr.bf16.gmra.mrb[0].mxu0 %v648
        %v683 = vpop.f32.mrb[0].mxu0
        %v684 = vadd.f32 %v341, %v683
        %v685 = vpop.f32.mrb[0].mxu0
        %v686 = vpop.f32.mrb[0].mxu0
        %v687 = vpop.f32.mrb[0].mxu0
        %688 = vdwg.mxu0
        %689 = vmax.xlane.f32.xlu0 %v684
        %v690 = vpop.xlane.xlu0 %689
        %v691 = vsub.f32 %v684, %v690
        %v692 = vmul.f32 %v691, 1.442695
        %v693 = vpow.pop %v692
        %694 = vadd.xlane.f32.xlu0 %v693
        %v695 = vpop.xlane.xlu0 %694
        %v696 = vrcp.pop %v695
        %v697 = vmul.f32 %v696, 0.03125
        %v698 = vmul.f32 %v693, %v697
        %v699 = vsub.f32 %v698, %v285
        %v700 = vpack.c.bf16 %v699, %v699
        %v701 = vmul.f32 %v647, 4.882813e-07
        %702 = vmatprep.subr.bf16.mxu0 0
        %703 = vmatpush1.bf16.msra.mxu0 %v326
        %704 = vmatprep.subr.bf16.mxu0 0
        %705 = vmatpush1.bf16.msra.mxu0 %v327
        %706 = vmatprep.subr.bf16.mxu0 0
        %707 = vmatpush1.bf16.msra.mxu0 %v328
        %708 = vmatprep.subr.bf16.mxu0 0
        %709 = vmatpush1.bf16.msra.mxu0 %v329
        %710 = vmatprep.subr.bf16.mxu0 0
        %711 = vmatpush1.bf16.msra.mxu0 %v330
        %712 = vmatprep.subr.bf16.mxu0 0
        %713 = vmatpush1.bf16.msra.mxu0 %v331
        %714 = vmatprep.subr.bf16.mxu0 0
        %715 = vmatpush1.bf16.msra.mxu0 %v332
        %716 = vmatprep.subr.bf16.mxu0 0
        %717 = vmatpush1.bf16.msra.mxu0 %v333
        %718 = vmatprep.subr.bf16.mxu0 0
        %719 = vmatpush1.bf16.msra.mxu0 0
        %720 = vmatprep.subr.bf16.mxu0 0
        %721 = vmatpush1.bf16.msra.mxu0 0
        %722 = vmatprep.subr.bf16.mxu0 0
        %723 = vmatpush1.bf16.msra.mxu0 0
        %724 = vmatprep.subr.bf16.mxu0 0
        %725 = vmatpush1.bf16.msra.mxu0 0
        %726 = vmatprep.subr.bf16.mxu0 0
        %727 = vmatpush1.bf16.msra.mxu0 0
        %728 = vmatprep.subr.bf16.mxu0 0
        %729 = vmatpush1.bf16.msra.mxu0 0
        %730 = vmatprep.subr.bf16.mxu0 0
        %731 = vmatpush1.bf16.msra.mxu0 0
        %732 = vmatprep.subr.bf16.mxu0 0
        %733 = vmatpush1.bf16.msra.mxu0 0
        %734 = vmatprep.mubr.bf16.mxu0 0
        %735 = vmatmul.mubr.bf16.gmra.mrb[0].mxu0 %v700
        %v736 = vpop.f32.mrb[0].mxu0
        %v737 = vadd.f32 %v701, %v736
        %v738 = vpop.f32.mrb[0].mxu0
        %v739 = vpop.f32.mrb[0].mxu0
        %v740 = vpop.f32.mrb[0].mxu0
        %741 = vdwg.mxu0
        %vm742 = vcmp.gt.f32.partialorder %v737, 0.0
        %vm743 = vcmp.lt.f32.partialorder %v737, 0.0
        %v744 = vsel %vm743, -0.0125, 0.0
        %v745 = vsel %vm742, 0.0125, %v744
        %v746 = vadd.f32 %v646, %v745
        %v747 = vmax.f32 %v746, -0.05
        %v748 = vmin.f32 %v747, 0.05
        %v749 = vadd.f32 %v282, %v748
        %v750 = vpack.c.bf16 %v749, %v749
        %751 = vmatprep.subr.bf16.mxu0 0
        %752 = vmatpush1.bf16.msra.mxu0 %v302
        %753 = vmatprep.subr.bf16.mxu0 0
        %754 = vmatpush1.bf16.msra.mxu0 %v303
        %755 = vmatprep.subr.bf16.mxu0 0
        %756 = vmatpush1.bf16.msra.mxu0 %v304
        %757 = vmatprep.subr.bf16.mxu0 0
        %758 = vmatpush1.bf16.msra.mxu0 %v305
        %759 = vmatprep.subr.bf16.mxu0 0
        %760 = vmatpush1.bf16.msra.mxu0 %v306
        %761 = vmatprep.subr.bf16.mxu0 0
        %762 = vmatpush1.bf16.msra.mxu0 %v307
        %763 = vmatprep.subr.bf16.mxu0 0
        %764 = vmatpush1.bf16.msra.mxu0 %v308
        %765 = vmatprep.subr.bf16.mxu0 0
        %766 = vmatpush1.bf16.msra.mxu0 %v309
        %767 = vmatprep.subr.bf16.mxu0 0
        %768 = vmatpush1.bf16.msra.mxu0 0
        %769 = vmatprep.subr.bf16.mxu0 0
        %770 = vmatpush1.bf16.msra.mxu0 0
        %771 = vmatprep.subr.bf16.mxu0 0
        %772 = vmatpush1.bf16.msra.mxu0 0
        %773 = vmatprep.subr.bf16.mxu0 0
        %774 = vmatpush1.bf16.msra.mxu0 0
        %775 = vmatprep.subr.bf16.mxu0 0
        %776 = vmatpush1.bf16.msra.mxu0 0
        %777 = vmatprep.subr.bf16.mxu0 0
        %778 = vmatpush1.bf16.msra.mxu0 0
        %779 = vmatprep.subr.bf16.mxu0 0
        %780 = vmatpush1.bf16.msra.mxu0 0
        %781 = vmatprep.subr.bf16.mxu0 0
        %782 = vmatpush1.bf16.msra.mxu0 0
        %783 = vmatprep.mubr.bf16.mxu0 0
        %784 = vmatmul.mubr.bf16.gmra.mrb[0].mxu0 %v750
        %v785 = vpop.f32.mrb[0].mxu0
        %v786 = vadd.f32 %v341, %v785
        %v787 = vpop.f32.mrb[0].mxu0
        %v788 = vpop.f32.mrb[0].mxu0
        %v789 = vpop.f32.mrb[0].mxu0
        %790 = vdwg.mxu0
        %791 = vmax.xlane.f32.xlu0 %v786
        %v792 = vpop.xlane.xlu0 %791
        %v793 = vsub.f32 %v786, %v792
        %v794 = vmul.f32 %v793, 1.442695
        %v795 = vpow.pop %v794
        %796 = vadd.xlane.f32.xlu0 %v795
        %v797 = vpop.xlane.xlu0 %796
        %v798 = vrcp.pop %v797
        %v799 = vmul.f32 %v798, 0.03125
        %v800 = vmul.f32 %v795, %v799
        %v801 = vsub.f32 %v800, %v285
        %v802 = vpack.c.bf16 %v801, %v801
        %v803 = vmul.f32 %v749, 4.882813e-07
        %804 = vmatprep.subr.bf16.mxu0 0
        %805 = vmatpush1.bf16.msra.mxu0 %v326
        %806 = vmatprep.subr.bf16.mxu0 0
        %807 = vmatpush1.bf16.msra.mxu0 %v327
        %808 = vmatprep.subr.bf16.mxu0 0
        %809 = vmatpush1.bf16.msra.mxu0 %v328
        %810 = vmatprep.subr.bf16.mxu0 0
        %811 = vmatpush1.bf16.msra.mxu0 %v329
        %812 = vmatprep.subr.bf16.mxu0 0
        %813 = vmatpush1.bf16.msra.mxu0 %v330
        %814 = vmatprep.subr.bf16.mxu0 0
        %815 = vmatpush1.bf16.msra.mxu0 %v331
        %816 = vmatprep.subr.bf16.mxu0 0
        %817 = vmatpush1.bf16.msra.mxu0 %v332
        %818 = vmatprep.subr.bf16.mxu0 0
        %819 = vmatpush1.bf16.msra.mxu0 %v333
        %820 = vmatprep.subr.bf16.mxu0 0
        %821 = vmatpush1.bf16.msra.mxu0 0
        %822 = vmatprep.subr.bf16.mxu0 0
        %823 = vmatpush1.bf16.msra.mxu0 0
        %824 = vmatprep.subr.bf16.mxu0 0
        %825 = vmatpush1.bf16.msra.mxu0 0
        %826 = vmatprep.subr.bf16.mxu0 0
        %827 = vmatpush1.bf16.msra.mxu0 0
        %828 = vmatprep.subr.bf16.mxu0 0
        %829 = vmatpush1.bf16.msra.mxu0 0
        %830 = vmatprep.subr.bf16.mxu0 0
        %831 = vmatpush1.bf16.msra.mxu0 0
        %832 = vmatprep.subr.bf16.mxu0 0
        %833 = vmatpush1.bf16.msra.mxu0 0
        %834 = vmatprep.subr.bf16.mxu0 0
        %835 = vmatpush1.bf16.msra.mxu0 0
        %836 = vmatprep.mubr.bf16.mxu0 0
        %837 = vmatmul.mubr.bf16.gmra.mrb[0].mxu0 %v802
        %v838 = vpop.f32.mrb[0].mxu0
        %v839 = vadd.f32 %v803, %v838
        %v840 = vpop.f32.mrb[0].mxu0
        %v841 = vpop.f32.mrb[0].mxu0
        %v842 = vpop.f32.mrb[0].mxu0
        %843 = vdwg.mxu0
        %vm844 = vcmp.gt.f32.partialorder %v839, 0.0
        %vm845 = vcmp.lt.f32.partialorder %v839, 0.0
        %v846 = vsel %vm845, -0.0125, 0.0
        %v847 = vsel %vm844, 0.0125, %v846
        %v848 = vadd.f32 %v748, %v847
        %v849 = vmax.f32 %v848, -0.05
        %v850 = vmin.f32 %v849, 0.05
        %v851 = vadd.f32 %v282, %v850
        %852 = vst [vmem:[%s268] sm:$0xff] %v851
        %s853 = sand.u32 %s169, 1
        %s854 = scalar_lea.sflag [#allocation3], %s853
        %s855 = sand.u32 %s169, 1
        %s856 = smul.addr %s855, 8
        %s857 = scalar_lea.vmem [#allocation2], %s856
        // Predicated region
        $region45: #{adversarial_feature_augment.1} parent=43 // pred_check
          %p858 = pneg %p179
        $region46: #{adversarial_feature_augment.1} parent=43 // pred_check_branch
          %860 = sbr.rel (%p858) target = $region48
        $region47: #{adversarial_feature_augment.1} parent=43 // pred_region
          %s862 = ssub.s32 128, 128
          %863 = vsyncadd %s854, %s862
          %s864 = smul.addr %s20, 128
          %s865 = scalar_lea.hbm %s6, %s864
          %s867 = sshll.u32 %s857, 4
          %s868 = int_to_ptr.vmem [resolvable:$true] %s867
          %870 = dma.vmem_to_hbm [thread:$0]  %s868, 128, %s865, %s854
        $region48: #{adversarial_feature_augment.1} parent=43 // pred_fallthru
          _
      $region44: #{adversarial_feature_augment.1} parent=5 // pred_fallthru
        _
      %p871 = scmp.le.s32.totalorder 2, %s15
      // Predicated region
      $region49: #{adversarial_feature_augment.1} parent=5 // pred_check
        %p872 = pneg %p871
      $region50: #{adversarial_feature_augment.1} parent=5 // pred_check_branch
        %874 = sbr.rel (%p872) target = $region52
      $region51: #{adversarial_feature_augment.1} parent=5 // pred_region
        %s875 = ssub.s32 %s15, 2
        // Predicated region
        $region53: #{adversarial_feature_augment.1} parent=51 // pred_check
          %p876 = pneg %p185
        $region54: #{adversarial_feature_augment.1} parent=51 // pred_check_branch
          %878 = sbr.rel (%p876) target = $region56
        $region55: #{adversarial_feature_augment.1} parent=51 // pred_region
          %s879 = sand.u32 %s170, 1
          %s880 = scalar_lea.sflag [#allocation3], %s879
          %s881 = sand.u32 %s170, 1
          %s882 = smul.addr %s881, 8
          %s883 = scalar_lea.vmem [#allocation2], %s882
          %884 = dma.done %s880, 128
        $region56: #{adversarial_feature_augment.1} parent=51 // pred_fallthru
          _
      $region52: #{adversarial_feature_augment.1} parent=5 // pred_fallthru
        _
    $region6: #{adversarial_feature_augment.1} parent=1 // loop_footer
      %s19 = sadd.s32 1, %s15
    $region7: #{adversarial_feature_augment.1} parent=1 // loop_footer_branch
      %14 = sbr.rel target = $region3
    $region8: #{adversarial_feature_augment.1} parent=1 // loop_exit
      _
    %885 = vsyncpa [#allocation3], 1
    %s886 = scalar_lea.sflag [#allocation3], 1
    %887 = vsyncpa %s886, 1

</llo_original>
